<compile_context>
chip_gen: v7x
topology: tpu7x:2x2x1
jax: 0.10.0
libtpu: 0.0.40
codegen_flags: <defaults>
</compile_context>

<pallas_src>
import jax
import jax.numpy as jnp
from jax.experimental import pallas as pl
from jax.experimental.pallas import tpu as pltpu


def _round_up(n, m):
    return ((n + m - 1) // m) * m


def mlp_img_kernel(x_ref, w1t_ref, b1_ref, w2t_ref, b2_ref, o_ref):
    """One batch tile: relu((relu(x @ W1t + b1)) @ W2t + b2).

    Weights arrive pre-transposed / lane-padded / pre-cast; accumulation and
    the bias+ReLU epilogue are f32 (VPU), matmul operands may be bf16 (MXU).
    """
    x = x_ref[...].astype(w1t_ref.dtype)                 # no-op when dtypes match
    h = jnp.dot(x, w1t_ref[...], preferred_element_type=jnp.float32)
    h = jnp.maximum(h + b1_ref[...], 0.0)                # f32 bias + ReLU
    y = jnp.dot(h.astype(w2t_ref.dtype), w2t_ref[...],
                preferred_element_type=jnp.float32)
    y = jnp.maximum(y + b2_ref[...], 0.0)
    o_ref[...] = y.astype(o_ref.dtype)


def prepare_mlp_img_params(w1, b1, w2, b2, compute_dtype=jnp.bfloat16):
    """One-time parameter prep (hoisted out of the per-call forward):
       transpose to (in, out) layout, lane-pad hid/out to 128, cast weights to
       the compute dtype. Biases stay f32 (epilogue is f32 on every chip)."""
    hid, inp = w1.shape
    out = w2.shape[0]
    hid_p = _round_up(hid, 128)
    out_p = _round_up(out, 128)

    w1t = jnp.asarray(w1, jnp.float32).T                 # (inp, hid)
    w2t = jnp.asarray(w2, jnp.float32).T                 # (hid, out)

    w1tp = jnp.zeros((inp, hid_p), jnp.float32).at[:, :hid].set(w1t).astype(compute_dtype)
    w2tp = jnp.zeros((hid_p, out_p), jnp.float32).at[:hid, :out].set(w2t).astype(compute_dtype)
    b1p = jnp.zeros((1, hid_p), jnp.float32).at[0, :hid].set(jnp.asarray(b1, jnp.float32))
    b2p = jnp.zeros((1, out_p), jnp.float32).at[0, :out].set(jnp.asarray(b2, jnp.float32))

    return dict(w1t=w1tp, b1=b1p, w2t=w2tp, b2=b2p,
                inp=inp, hid=hid, out=out,
                hid_p=hid_p, out_p=out_p, compute_dtype=compute_dtype)


def _vmem_limit_bytes():
    """Consistent tile-sizing budget == compiler VMEM grant, from the chip."""
    try:
        cap = int(pltpu.get_tpu_info().vmem_capacity_bytes)
    except Exception:
        cap = 64 << 20                                    # conservative (v7x per-TC)
    # ~75% headroom: ~48 MiB on v7x (64 MiB/TC), ~96 MiB on v5e/v6e (128 MiB).
    return min((cap * 3) // 4, 100 << 20)


def mlp_img_forward(x, params, *, block_b=1024, force_pallas=False):
    """x: (B, inp). params: output of prepare_mlp_img_params()."""
    cdt = params["compute_dtype"]
    inp, out = params["inp"], params["out"]
    hid_p, out_p = params["hid_p"], params["out_p"]
    w1t, b1, w2t, b2 = params["w1t"], params["b1"], params["w2t"], params["b2"]
    B = x.shape[0]
    out_dtype = x.dtype

    vmem_limit = _vmem_limit_bytes()
    w_item = jnp.dtype(cdt).itemsize
    a_item = 4
    # Resident (double-buffered) weights/biases + per-row streaming/intermediate cost.
    weight_bytes = 2 * (inp * hid_p + hid_p * out_p) * w_item + 2 * (hid_p + out_p) * a_item
    per_row_bytes = (2 * inp * w_item              # x tile, double-buffered
                     + 2 * out_p * a_item          # out tile, double-buffered
                     + hid_p * (a_item + w_item)   # h (f32) + h cast (cdt)
                     + out_p * a_item)             # y (f32)

    tiny = B * (inp * hid_p + hid_p * out_p) < (1 << 24)   # < ~16M MACs
    fits = weight_bytes + 8 * per_row_bytes + (2 << 20) <= vmem_limit
    use_pallas = fits and (force_pallas or not tiny)

    xc = x if x.dtype == cdt else x.astype(cdt)

    if not use_pallas:
        # Graceful XLA path: dispatch overhead dominates tiny problems, and
        # weights that don't fit VMEM would otherwise fail at compile time.
        h = jnp.maximum(jnp.dot(xc, w1t, preferred_element_type=jnp.float32) + b1, 0.0)
        y = jnp.maximum(jnp.dot(h.astype(cdt), w2t, preferred_element_type=jnp.float32) + b2, 0.0)
        y = y if out_p == out else y[:, :out]
        return y.astype(out_dtype)

    # --- batch tile: as big as the (consistent) VMEM budget allows ---
    max_tb = max(8, (((vmem_limit - weight_bytes) // max(per_row_bytes, 1)) // 8) * 8)
    tb = min(block_b, _round_up(B, 8), max_tb)
    if B > 8:
        # Keep >= 2 grid steps so the "parallel" batch axis feeds both v7x TCs.
        tb = min(tb, _round_up((B + 1) // 2, 8))
    tb = max(tb, 8)
    grid = (pl.cdiv(B, tb),)                       # ragged last tile handled by Pallas

    flops = 2 * B * (inp * hid_p + hid_p * out_p)
    bytes_accessed = (B * inp * w_item
                      + (inp * hid_p + hid_p * out_p) * w_item
                      + (hid_p + out_p) * a_item
                      + B * out_p * jnp.dtype(out_dtype).itemsize)

    y_padded = pl.pallas_call(
        mlp_img_kernel,
        out_shape=jax.ShapeDtypeStruct((B, out_p), out_dtype),
        grid=grid,
        in_specs=[
            pl.BlockSpec((tb, inp), lambda i: (i, 0)),      # x: streamed per batch tile
            pl.BlockSpec((inp, hid_p), lambda i: (0, 0)),   # W1t: VMEM resident
            pl.BlockSpec((1, hid_p), lambda i: (0, 0)),     # b1:  VMEM resident
            pl.BlockSpec((hid_p, out_p), lambda i: (0, 0)), # W2t: VMEM resident
            pl.BlockSpec((1, out_p), lambda i: (0, 0)),     # b2:  VMEM resident
        ],
        out_specs=pl.BlockSpec((tb, out_p), lambda i: (i, 0)),  # lane-dense store
        compiler_params=pltpu.CompilerParams(
            dimension_semantics=("parallel",),              # megacore sharding on v7x
            vmem_limit_bytes=int(vmem_limit),
        ),
        cost_estimate=pl.CostEstimate(
            flops=flops, transcendentals=0, bytes_accessed=int(bytes_accessed)),
    )(xc, w1t, b1, w2t, b2)

    # Only slice when out is not already lane-aligned (extra copy otherwise avoided).
    y = y_padded if out_p == out else y_padded[:, :out]
    return y.astype(out_dtype)


def make_params(inp_dim, hid_dim, out_dim, dtype=jnp.float32):
    """Deterministic init matching the PyTorch module's __init__:
       nn.init.eye_ on weights (rectangular identity), zeros on biases."""
    w1 = jnp.eye(hid_dim, inp_dim, dtype=dtype)   # fc1.weight: (hid, inp)
    b1 = jnp.zeros((hid_dim,), dtype=dtype)       # fc1.bias
    w2 = jnp.eye(out_dim, hid_dim, dtype=dtype)   # fc2.weight: (out, hid)
    b2 = jnp.zeros((out_dim,), dtype=dtype)       # fc2.bias
    return w1, b1, w2, b2


if __name__ == "__main__":
    # Small shapes consistent with the module: a batch of image-feature vectors.
    # B=20 deliberately exercises a 2-step grid with a ragged last batch tile.
    B, inp_dim, hid_dim, out_dim = 20, 32, 64, 16

    key = jax.random.PRNGKey(0)
    x = jax.random.normal(key, (B, inp_dim), dtype=jnp.float32)
    w1, b1, w2, b2 = make_params(inp_dim, hid_dim, out_dim)

    # Plain-JAX reference (same math as the PyTorch forward).
    ref = jnp.maximum(jnp.maximum(x @ w1.T + b1, 0.0) @ w2.T + b2, 0.0)

    # 1) Default bf16-operand path (f32 accumulation) through the Pallas kernel.
    params_bf16 = prepare_mlp_img_params(w1, b1, w2, b2, compute_dtype=jnp.bfloat16)
    out_bf16 = jax.block_until_ready(mlp_img_forward(x, params_bf16, force_pallas=True))
    assert out_bf16.shape == (B, out_dim)
    assert jnp.allclose(out_bf16, ref, atol=2e-2, rtol=2e-2)

    # 2) f32 compute path for exact parity with the PyTorch reference.
    params_f32 = prepare_mlp_img_params(w1, b1, w2, b2, compute_dtype=jnp.float32)
    out_f32 = jax.block_until_ready(mlp_img_forward(x, params_f32, force_pallas=True))
    assert out_f32.shape == (B, out_dim)
    assert jnp.allclose(out_f32, ref, atol=1e-5, rtol=1e-5)

    print("KERNEL_OK")
</pallas_src>

<mosaic_0001>
module attributes {stable_mosaic.version = 11 : i64} {
  func.func @mlp_img_kernel(%arg0: i32, %arg1: memref<16x32xbf16, #tpu.memory_space<vmem>>, %arg2: memref<32x128xbf16, #tpu.memory_space<vmem>>, %arg3: memref<1x128xf32, #tpu.memory_space<vmem>>, %arg4: memref<128x128xbf16, #tpu.memory_space<vmem>>, %arg5: memref<1x128xf32, #tpu.memory_space<vmem>>, %arg6: memref<16x128xf32, #tpu.memory_space<vmem>>) attributes {dimension_semantics = [#tpu.dimension_semantics<parallel>], iteration_bounds = array<i64: 2>, scalar_prefetch = 0 : i64, scratch_operands = 0 : i64, tpu.core_type = #tpu.core_type<tc>, window_params = [{transform_indices = @transform_0, window_bounds = array<i64: 16, 32>}, {pipeline_mode = #tpu.pipeline_mode<synchronous>, transform_indices = @transform_1, window_bounds = array<i64: 32, 128>}, {pipeline_mode = #tpu.pipeline_mode<synchronous>, transform_indices = @transform_2, window_bounds = array<i64: 1, 128>}, {pipeline_mode = #tpu.pipeline_mode<synchronous>, transform_indices = @transform_3, window_bounds = array<i64: 128, 128>}, {pipeline_mode = #tpu.pipeline_mode<synchronous>, transform_indices = @transform_4, window_bounds = array<i64: 1, 128>}, {transform_indices = @transform_5, window_bounds = array<i64: 16, 128>}]} {
    %c0 = arith.constant 0 : index
    %c0_0 = arith.constant 0 : index
    %0 = vector.load %arg1[%c0, %c0_0] : memref<16x32xbf16, #tpu.memory_space<vmem>>, vector<16x32xbf16>
    %c0_1 = arith.constant 0 : index
    %c0_2 = arith.constant 0 : index
    %1 = vector.load %arg2[%c0_1, %c0_2] : memref<32x128xbf16, #tpu.memory_space<vmem>>, vector<32x128xbf16>
    %cst = arith.constant dense<0.000000e+00> : vector<16x128xf32>
    %2 = tpu.matmul %0, %1, %cst {dimension_numbers = #tpu.dot_dimension_numbers<[1], [0], [0], [1], [0, 0, 1, 1], [], []>} : vector<16x32xbf16>, vector<32x128xbf16>, vector<16x128xf32> -> vector<16x128xf32>
    %c0_3 = arith.constant 0 : index
    %c0_4 = arith.constant 0 : index
    %3 = vector.load %arg3[%c0_3, %c0_4] : memref<1x128xf32, #tpu.memory_space<vmem>>, vector<1x128xf32>
    %4 = vector.broadcast %3 : vector<1x128xf32> to vector<16x128xf32>
    %5 = arith.addf %2, %4 : vector<16x128xf32>
    %cst_5 = arith.constant 0.000000e+00 : f32
    %6 = vector.broadcast %cst_5 : f32 to vector<16x128xf32>
    %7 = arith.maximumf %5, %6 : vector<16x128xf32>
    %8 = arith.truncf %7 : vector<16x128xf32> to vector<16x128xbf16>
    %c0_6 = arith.constant 0 : index
    %c0_7 = arith.constant 0 : index
    %9 = vector.load %arg4[%c0_6, %c0_7] : memref<128x128xbf16, #tpu.memory_space<vmem>>, vector<128x128xbf16>
    %cst_8 = arith.constant dense<0.000000e+00> : vector<16x128xf32>
    %10 = tpu.matmul %8, %9, %cst_8 {dimension_numbers = #tpu.dot_dimension_numbers<[1], [0], [0], [1], [0, 0, 1, 1], [], []>} : vector<16x128xbf16>, vector<128x128xbf16>, vector<16x128xf32> -> vector<16x128xf32>
    %c0_9 = arith.constant 0 : index
    %c0_10 = arith.constant 0 : index
    %11 = vector.load %arg5[%c0_9, %c0_10] : memref<1x128xf32, #tpu.memory_space<vmem>>, vector<1x128xf32>
    %12 = vector.broadcast %11 : vector<1x128xf32> to vector<16x128xf32>
    %13 = arith.addf %10, %12 : vector<16x128xf32>
    %cst_11 = arith.constant 0.000000e+00 : f32
    %14 = vector.broadcast %cst_11 : f32 to vector<16x128xf32>
    %15 = arith.maximumf %13, %14 : vector<16x128xf32>
    %c0_12 = arith.constant 0 : index
    %c0_13 = arith.constant 0 : index
    %16 = vector.load %arg6[%c0_12, %c0_13] : memref<16x128xf32, #tpu.memory_space<vmem>>, vector<16x128xf32>
    tpu.vector_store %arg6[%c0_12, %c0_13], %15 {strides = array<i32>} : memref<16x128xf32, #tpu.memory_space<vmem>>, vector<16x128xf32>,
    return
  }
  func.func @transform_0(%arg0: i32) -> (i32, i32) {
    %c0_i32 = arith.constant 0 : i32
    %c0_i32_0 = arith.constant 0 : i32
    return %arg0, %c0_i32 : i32, i32
  }
  func.func @transform_1(%arg0: i32) -> (i32, i32) {
    %c0_i32 = arith.constant 0 : i32
    %c0_i32_0 = arith.constant 0 : i32
    %c0_i32_1 = arith.constant 0 : i32
    return %c0_i32, %c0_i32_0 : i32, i32
  }
  func.func @transform_2(%arg0: i32) -> (i32, i32) {
    %c0_i32 = arith.constant 0 : i32
    %c0_i32_0 = arith.constant 0 : i32
    %c0_i32_1 = arith.constant 0 : i32
    return %c0_i32, %c0_i32_0 : i32, i32
  }
  func.func @transform_3(%arg0: i32) -> (i32, i32) {
    %c0_i32 = arith.constant 0 : i32
    %c0_i32_0 = arith.constant 0 : i32
    %c0_i32_1 = arith.constant 0 : i32
    return %c0_i32, %c0_i32_0 : i32, i32
  }
  func.func @transform_4(%arg0: i32) -> (i32, i32) {
    %c0_i32 = arith.constant 0 : i32
    %c0_i32_0 = arith.constant 0 : i32
    %c0_i32_1 = arith.constant 0 : i32
    return %c0_i32, %c0_i32_0 : i32, i32
  }
  func.func @transform_5(%arg0: i32) -> (i32, i32) {
    %c0_i32 = arith.constant 0 : i32
    %c0_i32_0 = arith.constant 0 : i32
    return %arg0, %c0_i32 : i32, i32
  }
}

</mosaic_0001>

<llo_original>
// kernel: tpu_custom_call.1
$region0: #{tpu_custom_call.1}
  #allocation0 [shape = 'u32[]', space=smem, size = 0x4, offset = 0x4, fixed_abs, tag = 'smem constant byte address 0x4 - core index']
  #allocation1 [shape = 'u32[144,128]{1,0:T(1,128)}', space=vmem, size = 0x12000, scoped, tag = 'internal scratch']
  %s0 = inlined_call_operand.hbm [shape: bf16[20,32], index: 0, kind: input, shape index: {}]
  %s1 = inlined_call_operand.hbm [shape: bf16[32,128], index: 1, kind: input, shape index: {}]
  %s2 = inlined_call_operand.vmem [shape: f32[1,128], index: 2, kind: input, shape index: {}]
  %s3 = inlined_call_operand.hbm [shape: bf16[128,128], index: 3, kind: input, shape index: {}]
  %s4 = inlined_call_operand.vmem [shape: f32[1,128], index: 4, kind: input, shape index: {}]
  %s5 = inlined_call_operand.hbm [shape: f32[20,128], index: 5, kind: output, shape index: {}]
  %s6 = sld [smem:[#allocation0]]
  $region65: #{tpu_custom_call.1} parent=0
    _
  %s8 = ssub.s32 1, %s6
  %s9 = scalar_select 0, %s8, %s6
  $region1: #{tpu_custom_call.1} parent=0
    #allocation2 [shape = 'u8[8192]{0}', space=vmem, size = 0x2000, scoped, tag = 'input window, operand 0']
    #allocation3 [shape = 's32[2]{0}', space=sflag, size = 0x8, scoped, tag = 'scoped memory for tpu_custom_call.1']
    #allocation4 [shape = 's32[2]{0}', space=sflag, size = 0x8, scoped, tag = 'scoped memory for tpu_custom_call.1']
    #allocation5 [shape = 'u8[8192]{0}', space=vmem, size = 0x2000, scoped, tag = 'input window, operand 1, single buffered']
    #allocation6 [shape = 's32[1]{0}', space=sflag, size = 0x4, scoped, tag = 'scoped memory for tpu_custom_call.1']
    #allocation7 [shape = 'u8[32768]{0}', space=vmem, size = 0x8000, scoped, tag = 'input window, operand 3, single buffered']
    #allocation8 [shape = 'u8[16384]{0}', space=vmem, size = 0x4000, scoped, tag = 'output window, operand 0']
    %10 = vsyncpa [#allocation3], 0
    %s11 = scalar_lea.sflag [#allocation3], 1
    %12 = vsyncpa %s11, 0
    %13 = vsyncpa [#allocation6], 0
    %14 = vsyncpa [#allocation4], 0
    %s15 = scalar_lea.sflag [#allocation4], 1
    %16 = vsyncpa %s15, 0
    loop: start=0, step=1, limit=4
    $region2: #{tpu_custom_call.1} parent=1 // loop_pre_header
      _
    $region3: #{tpu_custom_call.1} parent=1 // loop_header
      %s18 = sphi 0, %s22
      %p19 = scmp.ge.s32.totalorder %s18, 4
      %s28 = sphi 0, %s30
      %s31 = sphi 0, %s28
      %s32 = sphi 0, %s31
      %s48 = sphi 0, %s32
      %s52 = sphi 0, %s52
      %s54 = sphi 0, %s52
      %s55 = sphi 0, %s54
      %s69 = sphi 0, %s55
      %s73 = sphi 0, %s73
      %s75 = sphi 0, %s73
      %s76 = sphi 0, %s75
      %s90 = sphi 0, %s76
      %s94 = sphi 0, %s94
      %s96 = sphi 0, %s94
      %s97 = sphi 0, %s96
      %s111 = sphi 0, %s97
      %s115 = sphi 0, %s115
      %s117 = sphi 0, %s115
      %s118 = sphi 0, %s117
      %s132 = sphi 0, %s118
      %s138 = sphi 0, %s140
      %s141 = sphi 0, %s138
      %s142 = sphi 0, %s141
      %s158 = sphi 0, %s142
    $region4: #{tpu_custom_call.1} parent=1 // loop_header_branch
      %21 = sbr.rel (%p19) target = $region8
    $region5: #{tpu_custom_call.1} parent=1 // loop_body
      %s23 = ssub.s32 %s18, 1
      %s24 = ssub.s32 %s18, 2
      %s25 = sadd.s32 %s18, 1
      %s26 = ssub.s32 %s18, %s25
      %p27 = scmp.eq.s32.totalorder %s26, 0
      %s29 = sadd.s32 %s28, 1
      %s30 = scalar_select %p27, %s28, %s29
      %p33 = pneg %p27
      %p34 = scmp.eq.s32.totalorder %s18, 1
      %p35 = por %p33, %p34
      %p36 = scmp.ne.s32.totalorder %s28, %s31
      %p37 = scmp.eq.s32.totalorder %s18, 0
      %p38 = por %p36, %p37
      %p39 = scmp.ne.s32.totalorder %s28, %s31
      %p40 = scmp.eq.s32.totalorder %s23, 1
      %p41 = por %p39, %p40
      %p42 = scmp.ne.s32.totalorder %s31, %s32
      %p43 = scmp.eq.s32.totalorder %s23, 0
      %p44 = por %p42, %p43
      %p45 = scmp.ne.s32.totalorder %s31, %s32
      %p46 = scmp.eq.s32.totalorder %s24, 1
      %p47 = por %p45, %p46
      %p49 = scmp.ne.s32.totalorder %s32, %s48
      %p50 = scmp.eq.s32.totalorder %s24, 0
      %p51 = por %p49, %p50
      %s53 = sadd.s32 %s52, 1
      %p56 = scmp.eq.s32.totalorder %s18, 1
      %p57 = scmp.ne.s32.totalorder %s52, %s54
      %p58 = scmp.eq.s32.totalorder %s18, 0
      %p59 = por %p57, %p58
      %p60 = scmp.ne.s32.totalorder %s52, %s54
      %p61 = scmp.eq.s32.totalorder %s23, 1
      %p62 = por %p60, %p61
      %p63 = scmp.ne.s32.totalorder %s54, %s55
      %p64 = scmp.eq.s32.totalorder %s23, 0
      %p65 = por %p63, %p64
      %p66 = scmp.ne.s32.totalorder %s54, %s55
      %p67 = scmp.eq.s32.totalorder %s24, 1
      %p68 = por %p66, %p67
      %p70 = scmp.ne.s32.totalorder %s55, %s69
      %p71 = scmp.eq.s32.totalorder %s24, 0
      %p72 = por %p70, %p71
      %s74 = sadd.s32 %s73, 1
      %p77 = scmp.eq.s32.totalorder %s18, 1
      %p78 = scmp.ne.s32.totalorder %s73, %s75
      %p79 = scmp.eq.s32.totalorder %s18, 0
      %p80 = por %p78, %p79
      %p81 = scmp.ne.s32.totalorder %s73, %s75
      %p82 = scmp.eq.s32.totalorder %s23, 1
      %p83 = por %p81, %p82
      %p84 = scmp.ne.s32.totalorder %s75, %s76
      %p85 = scmp.eq.s32.totalorder %s23, 0
      %p86 = por %p84, %p85
      %p87 = scmp.ne.s32.totalorder %s75, %s76
      %p88 = scmp.eq.s32.totalorder %s24, 1
      %p89 = por %p87, %p88
      %p91 = scmp.ne.s32.totalorder %s76, %s90
      %p92 = scmp.eq.s32.totalorder %s24, 0
      %p93 = por %p91, %p92
      %s95 = sadd.s32 %s94, 1
      %p98 = scmp.eq.s32.totalorder %s18, 1
      %p99 = scmp.ne.s32.totalorder %s94, %s96
      %p100 = scmp.eq.s32.totalorder %s18, 0
      %p101 = por %p99, %p100
      %p102 = scmp.ne.s32.totalorder %s94, %s96
      %p103 = scmp.eq.s32.totalorder %s23, 1
      %p104 = por %p102, %p103
      %p105 = scmp.ne.s32.totalorder %s96, %s97
      %p106 = scmp.eq.s32.totalorder %s23, 0
      %p107 = por %p105, %p106
      %p108 = scmp.ne.s32.totalorder %s96, %s97
      %p109 = scmp.eq.s32.totalorder %s24, 1
      %p110 = por %p108, %p109
      %p112 = scmp.ne.s32.totalorder %s97, %s111
      %p113 = scmp.eq.s32.totalorder %s24, 0
      %p114 = por %p112, %p113
      %s116 = sadd.s32 %s115, 1
      %p119 = scmp.eq.s32.totalorder %s18, 1
      %p120 = scmp.ne.s32.totalorder %s115, %s117
      %p121 = scmp.eq.s32.totalorder %s18, 0
      %p122 = por %p120, %p121
      %p123 = scmp.ne.s32.totalorder %s115, %s117
      %p124 = scmp.eq.s32.totalorder %s23, 1
      %p125 = por %p123, %p124
      %p126 = scmp.ne.s32.totalorder %s117, %s118
      %p127 = scmp.eq.s32.totalorder %s23, 0
      %p128 = por %p126, %p127
      %p129 = scmp.ne.s32.totalorder %s117, %s118
      %p130 = scmp.eq.s32.totalorder %s24, 1
      %p131 = por %p129, %p130
      %p133 = scmp.ne.s32.totalorder %s118, %s132
      %p134 = scmp.eq.s32.totalorder %s24, 0
      %p135 = por %p133, %p134
      %s136 = ssub.s32 %s18, %s25
      %p137 = scmp.eq.s32.totalorder %s136, 0
      %s139 = sadd.s32 %s138, 1
      %s140 = scalar_select %p137, %s138, %s139
      %p143 = pneg %p137
      %p144 = scmp.eq.s32.totalorder %s18, 1
      %p145 = por %p143, %p144
      %p146 = scmp.ne.s32.totalorder %s138, %s141
      %p147 = scmp.eq.s32.totalorder %s18, 0
      %p148 = por %p146, %p147
      %p149 = scmp.ne.s32.totalorder %s138, %s141
      %p150 = scmp.eq.s32.totalorder %s23, 1
      %p151 = por %p149, %p150
      %p152 = scmp.ne.s32.totalorder %s141, %s142
      %p153 = scmp.eq.s32.totalorder %s23, 0
      %p154 = por %p152, %p153
      %p155 = scmp.ne.s32.totalorder %s141, %s142
      %p156 = scmp.eq.s32.totalorder %s24, 1
      %p157 = por %p155, %p156
      %p159 = scmp.ne.s32.totalorder %s142, %s158
      %p160 = scmp.eq.s32.totalorder %s24, 0
      %p161 = por %p159, %p160
      %p162 = scmp.le.s32.totalorder 1, %s18
      %p163 = scmp.lt.s32.totalorder %s18, 3
      %p164 = pnand %p162, %p163
      %p165 = pneg %p164
      // Predicated region
      $region9: #{tpu_custom_call.1} parent=5 // pred_check
        _
      $region10: #{tpu_custom_call.1} parent=5 // pred_check_branch
        %167 = sbr.rel (%p164) target = $region12
      $region11: #{tpu_custom_call.1} parent=5 // pred_region
        %s168 = ssub.s32 %s18, 1
        // Predicated region
        $region13: #{tpu_custom_call.1} parent=11 // pred_check
          %p169 = pneg %p65
        $region14: #{tpu_custom_call.1} parent=11 // pred_check_branch
          %171 = sbr.rel (%p169) target = $region16
        $region15: #{tpu_custom_call.1} parent=11 // pred_region
          %s173 = ssub.s32 256, 256
          %174 = vsyncadd [#allocation6], %s173
          %s175 = sshll.u32 [#allocation5], 4
          %s176 = int_to_ptr.vmem [resolvable:$true] %s175
          %181 = dma.hbm_to_vmem [thread:$0]  %s1, 256, %s176, [#allocation6], 64, 64, 4
        $region16: #{tpu_custom_call.1} parent=11 // pred_fallthru
          _
        // Predicated region
        $region17: #{tpu_custom_call.1} parent=11 // pred_check
          %p182 = pneg %p86
        $region18: #{tpu_custom_call.1} parent=11 // pred_check_branch
          %184 = sbr.rel (%p182) target = $region20
        $region19: #{tpu_custom_call.1} parent=11 // pred_region
          _
        $region20: #{tpu_custom_call.1} parent=11 // pred_fallthru
          _
        // Predicated region
        $region21: #{tpu_custom_call.1} parent=11 // pred_check
          %p185 = pneg %p107
        $region22: #{tpu_custom_call.1} parent=11 // pred_check_branch
          %187 = sbr.rel (%p185) target = $region24
        $region23: #{tpu_custom_call.1} parent=11 // pred_region
          %s189 = ssub.s32 1024, 1024
          %190 = vsyncadd [#allocation6], %s189
          %s191 = sshll.u32 [#allocation7], 4
          %s192 = int_to_ptr.vmem [resolvable:$true] %s191
          %197 = dma.hbm_to_vmem [thread:$0]  %s3, 1024, %s192, [#allocation6], 64, 64, 4
        $region24: #{tpu_custom_call.1} parent=11 // pred_fallthru
          _
        // Predicated region
        $region25: #{tpu_custom_call.1} parent=11 // pred_check
          %p198 = pneg %p128
        $region26: #{tpu_custom_call.1} parent=11 // pred_check_branch
          %200 = sbr.rel (%p198) target = $region28
        $region27: #{tpu_custom_call.1} parent=11 // pred_region
          _
        $region28: #{tpu_custom_call.1} parent=11 // pred_fallthru
          _
      $region12: #{tpu_custom_call.1} parent=5 // pred_fallthru
        _
      %p201 = scmp.lt.s32.totalorder %s18, 2
      // Predicated region
      $region29: #{tpu_custom_call.1} parent=5 // pred_check
        %p202 = pneg %p201
      $region30: #{tpu_custom_call.1} parent=5 // pred_check_branch
        %204 = sbr.rel (%p202) target = $region32
      $region31: #{tpu_custom_call.1} parent=5 // pred_region
        // Predicated region
        $region33: #{tpu_custom_call.1} parent=31 // pred_check
          %p205 = pneg %p38
        $region34: #{tpu_custom_call.1} parent=31 // pred_check_branch
          %207 = sbr.rel (%p205) target = $region36
        $region35: #{tpu_custom_call.1} parent=31 // pred_region
          %s208 = sand.u32 %s28, 1
          %s209 = scalar_lea.sflag [#allocation3], %s208
          %s210 = sand.u32 %s28, 1
          %s211 = smul.addr %s210, 8
          %s212 = scalar_lea.vmem [#allocation2], %s211
          %s213 = smul.u32 2, %s18
          %s214 = ssub.s32 3, %s213
          %p215 = scmp.lt.s32.totalorder %s214, 2
          %s216 = scalar_select %p215, %s214, 2
          %s217 = smul.u32 64, %s216
          %s219 = ssub.s32 128, %s217
          %220 = vsyncadd %s209, %s219
          %p221 = scmp.ne.s32.totalorder 0, %s217
          %s222 = smul.addr %s213, 64
          %s223 = scalar_lea.hbm %s0, %s222
          %s224 = smul.u32 4, %s216
          %s225 = sshll.u32 %s212, 4
          %s226 = int_to_ptr.vmem [resolvable:$true] %s225
          %s227 = sshll.u32 %s224, 4
          %231 = dma.hbm_to_vmem [thread:$0]  (%p221), %s223, %s227, %s226, %s209, 64, 64, 4
        $region36: #{tpu_custom_call.1} parent=31 // pred_fallthru
          _
      $region32: #{tpu_custom_call.1} parent=5 // pred_fallthru
        _
      %p232 = scmp.le.s32.totalorder 1, %s18
      %p233 = scmp.lt.s32.totalorder %s18, 3
      %p234 = pnand %p232, %p233
      %p235 = pneg %p234
      // Predicated region
      $region37: #{tpu_custom_call.1} parent=5 // pred_check
        _
      $region38: #{tpu_custom_call.1} parent=5 // pred_check_branch
        %237 = sbr.rel (%p234) target = $region40
      $region39: #{tpu_custom_call.1} parent=5 // pred_region
        %s238 = ssub.s32 %s18, 1
        %s239 = sand.u32 %s31, 1
        %s240 = scalar_lea.sflag [#allocation3], %s239
        %s241 = sand.u32 %s31, 1
        %s242 = smul.addr %s241, 8
        %s243 = scalar_lea.vmem [#allocation2], %s242
        // Predicated region
        $region41: #{tpu_custom_call.1} parent=39 // pred_check
          %p244 = pneg %p44
        $region42: #{tpu_custom_call.1} parent=39 // pred_check_branch
          %246 = sbr.rel (%p244) target = $region44
        $region43: #{tpu_custom_call.1} parent=39 // pred_region
          %247 = dma.done %s240, 128
        $region44: #{tpu_custom_call.1} parent=39 // pred_fallthru
          _
        // Predicated region
        $region45: #{tpu_custom_call.1} parent=39 // pred_check
          %p248 = pneg %p65
        $region46: #{tpu_custom_call.1} parent=39 // pred_check_branch
          %250 = sbr.rel (%p248) target = $region48
        $region47: #{tpu_custom_call.1} parent=39 // pred_region
          %251 = dma.done [#allocation6], 256
        $region48: #{tpu_custom_call.1} parent=39 // pred_fallthru
          _
        // Predicated region
        $region49: #{tpu_custom_call.1} parent=39 // pred_check
          %p252 = pneg %p107
        $region50: #{tpu_custom_call.1} parent=39 // pred_check_branch
          %254 = sbr.rel (%p252) target = $region52
        $region51: #{tpu_custom_call.1} parent=39 // pred_region
          %255 = dma.done [#allocation6], 1024
        $region52: #{tpu_custom_call.1} parent=39 // pred_fallthru
          _
        %s256 = sand.u32 %s31, 1
        %s257 = scalar_lea.sflag [#allocation3], %s256
        %s258 = sand.u32 %s31, 1
        %s259 = smul.addr %s258, 8
        %s260 = scalar_lea.vmem [#allocation2], %s259
        %p261 = pneg %p44
        %p262 = pneg %p41
        %p263 = pneg %p65
        %p264 = pneg %p62
        %p265 = pneg %p86
        %p266 = pneg %p83
        %p267 = pneg %p107
        %p268 = pneg %p104
        %p269 = pneg %p128
        %p270 = pneg %p125
        %p271 = pneg %p154
        %p272 = pneg %p151
        %s273 = sand.u32 %s141, 1
        %s274 = scalar_lea.sflag [#allocation4], %s273
        %s275 = sand.u32 %s141, 1
        %s276 = smul.addr %s275, 16
        %s277 = scalar_lea.vmem [#allocation8], %s276
        %s278 = smul.u32 2, %s23
        %s279 = ssub.s32 3, %s278
        %p280 = scmp.lt.s32.totalorder %s279, 2
        %s281 = scalar_select %p280, %s279, 2
        %s282 = smul.u32 64, %s281
        %s283 = smul.u32 2, %s23
        %s284 = ssub.s32 3, %s283
        %p285 = scmp.lt.s32.totalorder %s284, 2
        %s286 = scalar_select %p285, %s284, 2
        %s287 = smul.u32 128, %s286
        %v289 = vld [vmem:[%s243] sm:$0xf]
        %v290 = vld [vmem:[%s243 + $0x4] sm:$0xf]
        %v291 = vld [vmem:[#allocation5] sm:$0xf]
        %v292 = vld [vmem:[#allocation5 + $0x4] sm:$0xf]
        %v293 = vld [vmem:[#allocation5 + $0x8] sm:$0xf]
        %v294 = vld [vmem:[#allocation5 + $0xc] sm:$0xf]
        %v295 = vld [vmem:[%s2] sm:$0x1]
        %v297 = vlaneseq
        %v298 = vshrl.u32 %v297, 7
        %v299 = vsub.s32 0, %v298
        %v300 = vrot.slane %v295, %v299
        %v304 = vunpack.c.l.b16 %v289
        %v305 = vunpack.c.l.b16 %v290
        %v306 = vpack.c.b16 %v305, %v304
        %v311 = vunpack.c.l.b16 %v291
        %v312 = vunpack.c.l.b16 %v292
        %v313 = vunpack.c.l.b16 %v293
        %v314 = vunpack.c.l.b16 %v294
        %v315 = vpack.c.b16 %v312, %v311
        %v316 = vpack.c.b16 %v314, %v313
        %vm319 = vcmask 261120
        %v321 = vsel %vm319, %v306, 0
        %323 = vmatprep.subr.bf16.mxu0 0
        %324 = vmatpush1.bf16.msra.mxu0 %v315
        %325 = vmatprep.subr.bf16.mxu0 0
        %326 = vmatpush1.bf16.msra.mxu0 %v316
        %327 = vmatprep.subr.bf16.mxu0 0
        %328 = vmatpush1.bf16.msra.mxu0 0
        %329 = vmatprep.subr.bf16.mxu0 0
        %330 = vmatpush1.bf16.msra.mxu0 0
        %331 = vmatprep.subr.bf16.mxu0 0
        %332 = vmatpush1.bf16.msra.mxu0 0
        %333 = vmatprep.subr.bf16.mxu0 0
        %334 = vmatpush1.bf16.msra.mxu0 0
        %335 = vmatprep.subr.bf16.mxu0 0
        %336 = vmatpush1.bf16.msra.mxu0 0
        %337 = vmatprep.subr.bf16.mxu0 0
        %338 = vmatpush1.bf16.msra.mxu0 0
        %339 = vmatprep.subr.bf16.mxu0 0
        %340 = vmatpush1.bf16.msra.mxu0 0
        %341 = vmatprep.subr.bf16.mxu0 0
        %342 = vmatpush1.bf16.msra.mxu0 0
        %343 = vmatprep.subr.bf16.mxu0 0
        %344 = vmatpush1.bf16.msra.mxu0 0
        %345 = vmatprep.subr.bf16.mxu0 0
        %346 = vmatpush1.bf16.msra.mxu0 0
        %347 = vmatprep.subr.bf16.mxu0 0
        %348 = vmatpush1.bf16.msra.mxu0 0
        %349 = vmatprep.subr.bf16.mxu0 0
        %350 = vmatpush1.bf16.msra.mxu0 0
        %351 = vmatprep.subr.bf16.mxu0 0
        %352 = vmatpush1.bf16.msra.mxu0 0
        %353 = vmatprep.subr.bf16.mxu0 0
        %354 = vmatpush1.bf16.msra.mxu0 0
        %355 = vmatprep.mubr.bf16.mxu0 0
        %356 = vmatmul.mubr.bf16.gmra.mrb[0].mxu0 %v321
        %v357 = vpop.f32.mrb[0].mxu0
        %v358 = vadd.f32 %v300, %v357
        %v359 = vpop.f32.mrb[0].mxu0
        %v360 = vpop.f32.mrb[0].mxu0
        %v361 = vadd.f32 %v300, %v360
        %v362 = vpop.f32.mrb[0].mxu0
        %363 = vdwg.mxu0
        %v364 = vmax.f32 %v358, 0.0
        %v365 = vmax.f32 %v361, 0.0
        %v366 = vpack.c.bf16 %v365, %v364
        %v367 = vld [vmem:[#allocation7] sm:$0xf]
        %v368 = vld [vmem:[#allocation7 + $0x4] sm:$0xf]
        %v369 = vld [vmem:[#allocation7 + $0x8] sm:$0xf]
        %v370 = vld [vmem:[#allocation7 + $0xc] sm:$0xf]
        %v371 = vld [vmem:[#allocation7 + $0x10] sm:$0xf]
        %v372 = vld [vmem:[#allocation7 + $0x14] sm:$0xf]
        %v373 = vld [vmem:[#allocation7 + $0x18] sm:$0xf]
        %v374 = vld [vmem:[#allocation7 + $0x1c] sm:$0xf]
        %v375 = vld [vmem:[#allocation7 + $0x20] sm:$0xf]
        %v376 = vld [vmem:[#allocation7 + $0x24] sm:$0xf]
        %v377 = vld [vmem:[#allocation7 + $0x28] sm:$0xf]
        %v378 = vld [vmem:[#allocation7 + $0x2c] sm:$0xf]
        %v379 = vld [vmem:[#allocation7 + $0x30] sm:$0xf]
        %v380 = vld [vmem:[#allocation7 + $0x34] sm:$0xf]
        %v381 = vld [vmem:[#allocation7 + $0x38] sm:$0xf]
        %v382 = vld [vmem:[#allocation7 + $0x3c] sm:$0xf]
        %v383 = vld [vmem:[%s4] sm:$0x1]
        %v385 = vlaneseq
        %v386 = vshrl.u32 %v385, 7
        %v387 = vsub.s32 0, %v386
        %v388 = vrot.slane %v383, %v387
        %v406 = vunpack.c.l.b16 %v367
        %v407 = vunpack.c.l.b16 %v368
        %v408 = vunpack.c.l.b16 %v369
        %v409 = vunpack.c.l.b16 %v370
        %v410 = vunpack.c.l.b16 %v371
        %v411 = vunpack.c.l.b16 %v372
        %v412 = vunpack.c.l.b16 %v373
        %v413 = vunpack.c.l.b16 %v374
        %v414 = vunpack.c.l.b16 %v375
        %v415 = vunpack.c.l.b16 %v376
        %v416 = vunpack.c.l.b16 %v377
        %v417 = vunpack.c.l.b16 %v378
        %v418 = vunpack.c.l.b16 %v379
        %v419 = vunpack.c.l.b16 %v380
        %v420 = vunpack.c.l.b16 %v381
        %v421 = vunpack.c.l.b16 %v382
        %v422 = vpack.c.b16 %v407, %v406
        %v423 = vpack.c.b16 %v409, %v408
        %v424 = vpack.c.b16 %v411, %v410
        %v425 = vpack.c.b16 %v413, %v412
        %v426 = vpack.c.b16 %v415, %v414
        %v427 = vpack.c.b16 %v417, %v416
        %v428 = vpack.c.b16 %v419, %v418
        %v429 = vpack.c.b16 %v421, %v420
        %438 = vmatprep.subr.bf16.mxu0 0
        %439 = vmatpush1.bf16.msra.mxu0 %v422
        %440 = vmatprep.subr.bf16.mxu0 0
        %441 = vmatpush1.bf16.msra.mxu0 %v423
        %442 = vmatprep.subr.bf16.mxu0 0
        %443 = vmatpush1.bf16.msra.mxu0 %v424
        %444 = vmatprep.subr.bf16.mxu0 0
        %445 = vmatpush1.bf16.msra.mxu0 %v425
        %446 = vmatprep.subr.bf16.mxu0 0
        %447 = vmatpush1.bf16.msra.mxu0 %v426
        %448 = vmatprep.subr.bf16.mxu0 0
        %449 = vmatpush1.bf16.msra.mxu0 %v427
        %450 = vmatprep.subr.bf16.mxu0 0
        %451 = vmatpush1.bf16.msra.mxu0 %v428
        %452 = vmatprep.subr.bf16.mxu0 0
        %453 = vmatpush1.bf16.msra.mxu0 %v429
        %454 = vmatprep.subr.bf16.mxu0 0
        %455 = vmatpush1.bf16.msra.mxu0 0
        %456 = vmatprep.subr.bf16.mxu0 0
        %457 = vmatpush1.bf16.msra.mxu0 0
        %458 = vmatprep.subr.bf16.mxu0 0
        %459 = vmatpush1.bf16.msra.mxu0 0
        %460 = vmatprep.subr.bf16.mxu0 0
        %461 = vmatpush1.bf16.msra.mxu0 0
        %462 = vmatprep.subr.bf16.mxu0 0
        %463 = vmatpush1.bf16.msra.mxu0 0
        %464 = vmatprep.subr.bf16.mxu0 0
        %465 = vmatpush1.bf16.msra.mxu0 0
        %466 = vmatprep.subr.bf16.mxu0 0
        %467 = vmatpush1.bf16.msra.mxu0 0
        %468 = vmatprep.subr.bf16.mxu0 0
        %469 = vmatpush1.bf16.msra.mxu0 0
        %470 = vmatprep.mubr.bf16.mxu0 0
        %471 = vmatmul.mubr.bf16.gmra.mrb[0].mxu0 %v366
        %v472 = vpop.f32.mrb[0].mxu0
        %v473 = vadd.f32 %v388, %v472
        %v474 = vpop.f32.mrb[0].mxu0
        %v475 = vpop.f32.mrb[0].mxu0
        %v476 = vadd.f32 %v388, %v475
        %v477 = vpop.f32.mrb[0].mxu0
        %478 = vdwg.mxu0
        %v479 = vmax.f32 %v473, 0.0
        %v480 = vmax.f32 %v476, 0.0
        %481 = vst [vmem:[%s277] sm:$0xff] %v479
        %482 = vst [vmem:[%s277 + $0x8] sm:$0xff] %v480
        %s483 = sand.u32 %s141, 1
        %s484 = scalar_lea.sflag [#allocation4], %s483
        %s485 = sand.u32 %s141, 1
        %s486 = smul.addr %s485, 16
        %s487 = scalar_lea.vmem [#allocation8], %s486
        // Predicated region
        $region53: #{tpu_custom_call.1} parent=39 // pred_check
          %p488 = pneg %p151
        $region54: #{tpu_custom_call.1} parent=39 // pred_check_branch
          %490 = sbr.rel (%p488) target = $region56
        $region55: #{tpu_custom_call.1} parent=39 // pred_region
          %s491 = smul.u32 2, %s23
          %s492 = ssub.s32 3, %s491
          %p493 = scmp.lt.s32.totalorder %s492, 2
          %s494 = scalar_select %p493, %s492, 2
          %s495 = smul.u32 128, %s494
          %s497 = ssub.s32 256, %s495
          %498 = vsyncadd %s484, %s497
          %p499 = scmp.ne.s32.totalorder 0, %s495
          %s500 = smul.addr %s491, 128
          %s501 = scalar_lea.hbm %s5, %s500
          %s502 = smul.u32 8, %s494
          %s503 = sshll.u32 %s487, 4
          %s504 = int_to_ptr.vmem [resolvable:$true] %s503
          %s505 = sshll.u32 %s502, 4
          %509 = dma.vmem_to_hbm [thread:$0]  (%p499), %s504, %s505, %s501, %s484, 128, 128, 8
        $region56: #{tpu_custom_call.1} parent=39 // pred_fallthru
          _
      $region40: #{tpu_custom_call.1} parent=5 // pred_fallthru
        _
      %p510 = scmp.le.s32.totalorder 2, %s18
      // Predicated region
      $region57: #{tpu_custom_call.1} parent=5 // pred_check
        %p511 = pneg %p510
      $region58: #{tpu_custom_call.1} parent=5 // pred_check_branch
        %513 = sbr.rel (%p511) target = $region60
      $region59: #{tpu_custom_call.1} parent=5 // pred_region
        %s514 = ssub.s32 %s18, 2
        // Predicated region
        $region61: #{tpu_custom_call.1} parent=59 // pred_check
          %p515 = pneg %p157
        $region62: #{tpu_custom_call.1} parent=59 // pred_check_branch
          %517 = sbr.rel (%p515) target = $region64
        $region63: #{tpu_custom_call.1} parent=59 // pred_region
          %s518 = sand.u32 %s142, 1
          %s519 = scalar_lea.sflag [#allocation4], %s518
          %s520 = sand.u32 %s142, 1
          %s521 = smul.addr %s520, 16
          %s522 = scalar_lea.vmem [#allocation8], %s521
          %523 = dma.done %s519, 256
        $region64: #{tpu_custom_call.1} parent=59 // pred_fallthru
          _
      $region60: #{tpu_custom_call.1} parent=5 // pred_fallthru
        _
    $region6: #{tpu_custom_call.1} parent=1 // loop_footer
      %s22 = sadd.s32 1, %s18
    $region7: #{tpu_custom_call.1} parent=1 // loop_footer_branch
      %17 = sbr.rel target = $region3
    $region8: #{tpu_custom_call.1} parent=1 // loop_exit
      _
    %524 = vsyncpa [#allocation3], 1
    %s525 = scalar_lea.sflag [#allocation3], 1
    %526 = vsyncpa %s525, 1
    %527 = vsyncpa [#allocation6], 1
    %528 = vsyncpa [#allocation4], 1
    %s529 = scalar_lea.sflag [#allocation4], 1
    %530 = vsyncpa %s529, 1

</llo_original>
